<compile_context>
chip_gen: v5e
topology: v5e:2x2
jax: 0.10.0
libtpu: 0.0.40
codegen_flags: <defaults>
</compile_context>

<pallas_src>
import functools

import jax
import jax.numpy as jnp
from jax import lax
from jax.experimental import pallas as pl
from jax.experimental.pallas import tpu as pltpu


# Accumulator plane indices.
_INTER_SOFT, _SUM_PROBS, _SUM_OH, _INTER_HARD, _SUM_PRED, _NLL = range(6)
_NUM_PLANES = 6


def _loss_stats_kernel(pred_ref, tgt_ref, acc_ref):
    """Accumulates per-(class, lane) sufficient statistics.

    pred_ref: [C, TH, LW] logits tile (any float dtype; cast to f32 here)
    tgt_ref : [TH, LW]    int32 class indices tile
    acc_ref : [1, 6, C, LW] f32 accumulator, planes =
              [soft_inter, sum_probs, sum_oh, hard_inter, sum_pred, nll]
    """
    h = pl.program_id(1)

    @pl.when(h == 0)
    def _init():
        acc_ref[...] = jnp.zeros_like(acc_ref)

    x = pred_ref[...].astype(jnp.float32)              # [C, TH, LW]
    t = tgt_ref[...]                                   # [TH, LW] i32
    C = x.shape[0]

    # ---- softmax / log-softmax over the channel axis (axis 0) ----
    m = jnp.max(x, axis=0, keepdims=True)              # [1, TH, LW]
    xm = x - m
    e = jnp.exp(xm)
    s = jnp.sum(e, axis=0, keepdims=True)              # [1, TH, LW]
    probs = e * pl.reciprocal(s, approx=False)         # [C, TH, LW]
    logp = xm - jnp.log(s)                             # [C, TH, LW]

    # ---- one-hot of target along channel axis ----
    c_iota = lax.broadcasted_iota(jnp.int32, x.shape, 0)        # [C, TH, LW]
    oh = (t[None, :, :] == c_iota).astype(jnp.float32)          # [C, TH, LW]

    # ---- argmax one-hot: reuse the softmax max, first occurrence on ties ----
    is_max = (x == m)                                            # [C, TH, LW]
    idx = jnp.min(jnp.where(is_max, c_iota, jnp.int32(C)), axis=0)  # [TH, LW]
    pc_oh = (idx[None, :, :] == c_iota).astype(jnp.float32)      # [C, TH, LW]

    # ---- partial sums over the row axis -> [C, LW] planes ----
    planes = (
        jnp.sum(probs * oh, axis=1),        # soft intersection (Tversky inter)
        jnp.sum(probs, axis=1),             # sum(probs): fps = this - inter
        jnp.sum(oh, axis=1),                # target count: fns = this - inter
        jnp.sum(pc_oh * oh, axis=1),        # hard (argmax) intersection (dice)
        jnp.sum(pc_oh, axis=1),             # argmax prediction count (dice)
        -jnp.sum(logp * oh, axis=1),        # NLL attributed to the target class
    )
    for j, plane in enumerate(planes):
        acc_ref[0, j, :, :] = acc_ref[0, j, :, :] + plane


def _choose_lane_fold(H, W, lane_target=128):
    """Smallest divisor k of H such that k*W >= lane_target (else largest)."""
    best = 1
    for k in range(1, H + 1):
        if H % k == 0:
            best = k
            if k * W >= lane_target:
                break
    return best


def _choose_row_tile(hk, c, lw, max_block_bytes=1 << 20):
    """Row tile: a divisor of hk (multiple of 8, or hk itself) whose f32 pred
    block stays under max_block_bytes (keeps temporaries well inside VMEM on
    all generations, including v7x's smaller VMEM)."""
    bytes_per_row = c * lw * 4
    max_rows = max(1, max_block_bytes // bytes_per_row)
    if hk <= max_rows:
        return hk
    best = None
    d = 8
    while d <= max_rows:
        if hk % d == 0:
            best = d
        d += 8
    # TODO(synk): add cdiv grid + in-kernel row masking for shapes whose H//k
    # has no small multiple-of-8 divisor (falls back to one big tile here).
    return best if best is not None else hk


@functools.partial(jax.jit, static_argnames=("num_classes",))
def tversky_ce_dice_loss(pred, target, num_classes,
                         alpha=0.5, beta=0.5,
                         cross_entropy_weight=0.5, tversky_weight=0.5,
                         epsilon=1e-6):
    """Equivalent of TverskyCrossEntropyDiceWeightedLoss.forward(pred, target)."""
    N, C, H, W = pred.shape
    assert C == num_classes

    # Lane-density fold: view [H, W] as [H//k, k*W].  This is a contiguous
    # (free) reshape — no transpose, no data movement, no dtype upcast.
    k = _choose_lane_fold(H, W)
    HK, LW = H // k, k * W
    pred_v = pred.reshape(N, C, HK, LW)
    tgt_v = target.reshape(N, HK, LW).astype(jnp.int32)

    TH = _choose_row_tile(HK, C, LW)
    assert HK % TH == 0
    grid = (N, HK // TH)

    acc = pl.pallas_call(
        _loss_stats_kernel,
        out_shape=jax.ShapeDtypeStruct((N, _NUM_PLANES, C, LW), jnp.float32),
        grid_spec=pltpu.PrefetchScalarGridSpec(
            num_scalar_prefetch=0,
            grid=grid,
            in_specs=[
                pl.BlockSpec((pl.Squeezed(), C, TH, LW),
                             lambda n, h: (n, 0, h, 0)),
                pl.BlockSpec((pl.Squeezed(), TH, LW),
                             lambda n, h: (n, h, 0)),
            ],
            out_specs=pl.BlockSpec((1, _NUM_PLANES, C, LW),
                                   lambda n, h: (n, 0, 0, 0)),
        ),
        compiler_params=pltpu.CompilerParams(
            dimension_semantics=("parallel", "arbitrary"),
            vmem_limit_bytes=32 << 20,
        ),
    )(pred_v, tgt_v)

    # ---- tiny scalar glue in plain JAX ----
    acc = jnp.sum(acc, axis=0)                          # [6, C, LW]
    inter_soft = acc[_INTER_SOFT]
    sum_probs = acc[_SUM_PROBS]
    sum_oh = acc[_SUM_OH]
    inter_hard = acc[_INTER_HARD]
    sum_pred = acc[_SUM_PRED]
    nll_cw = acc[_NLL]

    # class_dice -> per-class weights for cross entropy
    inter_d = jnp.sum(inter_hard, axis=1)               # [C]
    psum = jnp.sum(sum_pred, axis=1)                    # [C]
    tsum = jnp.sum(sum_oh, axis=1)                      # [C]
    nll_c = jnp.sum(nll_cw, axis=1)                     # [C]
    dice = 2.0 * inter_d / (psum + tsum + epsilon)
    class_w = 1.0 - dice

    # weighted cross entropy (mean reduction, matching torch's weight normalization)
    ce = jnp.sum(class_w * nll_c) / jnp.sum(class_w * tsum)

    # Tversky: sums over dims (0, 2) of NCHW -> per-(class, original W column)
    def unfold(a):                                      # [C, k*W] -> [C, W]
        return jnp.sum(a.reshape(C, k, W), axis=1)

    inter_w = unfold(inter_soft)
    fps_w = unfold(sum_probs) - inter_w
    fns_w = unfold(sum_oh) - inter_w
    t_mean = jnp.mean(inter_w / (inter_w + alpha * fps_w + beta * fns_w))
    tversky = 1.0 - t_mean

    return cross_entropy_weight * ce + tversky_weight * tversky


def _reference_loss(pred, target, num_classes,
                    alpha=0.5, beta=0.5, epsilon=1e-6):
    """Pure-JAX reference mirroring the PyTorch module, for verification."""
    pred = pred.astype(jnp.float32)
    C = num_classes
    # class_dice
    pred_class = jnp.argmax(pred, axis=1)                           # [N, H, W]
    weights = []
    for c in range(C):
        p = (pred_class == c)
        t = (target == c)
        inter = jnp.sum(p & t).astype(jnp.float32)
        union = jnp.sum(p) + jnp.sum(t) + epsilon
        weights.append(1.0 - 2.0 * inter / union)
    w = jnp.stack(weights)
    # weighted cross entropy (mean reduction)
    logp = jax.nn.log_softmax(pred, axis=1)                         # [N, C, H, W]
    oh = jax.nn.one_hot(target, C, dtype=jnp.float32)               # [N, H, W, C]
    oh = jnp.transpose(oh, (0, 3, 1, 2))                            # [N, C, H, W]
    nll = -jnp.sum(logp * oh, axis=1)                               # [N, H, W]
    wpix = w[target]
    ce = jnp.sum(wpix * nll) / jnp.sum(wpix)
    # tversky (dims = (0, 2) -> per (c, w))
    probs = jax.nn.softmax(pred, axis=1)
    inter = jnp.sum(probs * oh, axis=(0, 2))
    fps = jnp.sum(probs * (1.0 - oh), axis=(0, 2))
    fns = jnp.sum((1.0 - probs) * oh, axis=(0, 2))
    tv = 1.0 - jnp.mean(inter / (inter + alpha * fps + beta * fns))
    return 0.5 * ce + 0.5 * tv


if __name__ == "__main__":
    key = jax.random.PRNGKey(0)
    k_pred, k_tgt = jax.random.split(key)

    N, C, H, W = 2, 4, 16, 16
    pred = jax.random.normal(k_pred, (N, C, H, W), dtype=jnp.float32)
    target = jax.random.randint(k_tgt, (N, H, W), 0, C, dtype=jnp.int32)

    loss = tversky_ce_dice_loss(pred, target, num_classes=C)
    loss = jax.block_until_ready(loss)

    ref = jax.block_until_ready(_reference_loss(pred, target, C))
    assert jnp.allclose(loss, ref, rtol=2e-3, atol=2e-3), (loss, ref)

    print("KERNEL_OK")
</pallas_src>

<mosaic_0001>
module attributes {stable_mosaic.version = 11 : i64} {
  func.func @_loss_stats_kernel(%arg0: i32, %arg1: i32, %arg2: memref<1x4x2x128xf32, #tpu.memory_space<vmem>>, %arg3: memref<1x2x128xi32, #tpu.memory_space<vmem>>, %arg4: memref<1x6x4x128xf32, #tpu.memory_space<vmem>>) attributes {dimension_semantics = [#tpu.dimension_semantics<parallel>, #tpu.dimension_semantics<arbitrary>], iteration_bounds = array<i64: 2, 1>, scalar_prefetch = 0 : i64, scratch_operands = 0 : i64, tpu.core_type = #tpu.core_type<tc>, window_params = [{transform_indices = @transform_0, window_bounds = array<i64: 1, 4, 2, 128>}, {transform_indices = @transform_1, window_bounds = array<i64: 1, 2, 128>}, {transform_indices = @transform_2, window_bounds = array<i64: 1, 6, 4, 128>}]} {
    %c0_i32 = arith.constant 0 : i32
    %0 = arith.cmpi eq, %arg1, %c0_i32 : i32
    %1 = arith.extui %0 : i1 to i32
    %c0_i32_0 = arith.constant 0 : i32
    %2 = arith.cmpi ne, %1, %c0_i32_0 : i32
    scf.if %2 {
      %cst_59 = arith.constant 0.000000e+00 : f32
      %83 = vector.broadcast %cst_59 : f32 to vector<1x6x4x128xf32>
      %c0_60 = arith.constant 0 : index
      %c0_61 = arith.constant 0 : index
      %c0_62 = arith.constant 0 : index
      %c0_63 = arith.constant 0 : index
      %84 = vector.load %arg4[%c0_60, %c0_61, %c0_62, %c0_63] : memref<1x6x4x128xf32, #tpu.memory_space<vmem>>, vector<1x6x4x128xf32>
      tpu.vector_store %arg4[%c0_60, %c0_61, %c0_62, %c0_63], %83 {strides = array<i32>} : memref<1x6x4x128xf32, #tpu.memory_space<vmem>>, vector<1x6x4x128xf32>,
    } else {
    }
    %c0 = arith.constant 0 : index
    %c0_1 = arith.constant 0 : index
    %c0_2 = arith.constant 0 : index
    %c0_3 = arith.constant 0 : index
    %3 = vector.load %arg2[%c0, %c0_1, %c0_2, %c0_3] : memref<1x4x2x128xf32, #tpu.memory_space<vmem>>, vector<1x4x2x128xf32>
    %4 = vector.shape_cast %3 : vector<1x4x2x128xf32> to vector<4x2x128xf32>
    %c0_4 = arith.constant 0 : index
    %c0_5 = arith.constant 0 : index
    %c0_6 = arith.constant 0 : index
    %5 = vector.load %arg3[%c0_4, %c0_5, %c0_6] : memref<1x2x128xi32, #tpu.memory_space<vmem>>, vector<1x2x128xi32>
    %6 = vector.shape_cast %5 : vector<1x2x128xi32> to vector<2x128xi32>
    %cst = arith.constant dense<0xFF800000> : vector<2x128xf32>
    %7 = vector.multi_reduction <maximumf>, %4, %cst [0] : vector<4x2x128xf32> to vector<2x128xf32>
    %8 = vector.shape_cast %7 : vector<2x128xf32> to vector<1x2x128xf32>
    %9 = vector.broadcast %8 : vector<1x2x128xf32> to vector<4x2x128xf32>
    %10 = arith.subf %4, %9 : vector<4x2x128xf32>
    %11 = math.exp %10 : vector<4x2x128xf32>
    %cst_7 = arith.constant dense<0.000000e+00> : vector<2x128xf32>
    %12 = vector.multi_reduction <add>, %11, %cst_7 [0] : vector<4x2x128xf32> to vector<2x128xf32>
    %13 = vector.shape_cast %12 : vector<2x128xf32> to vector<1x2x128xf32>
    %14 = tpu.reciprocal %13 : vector<1x2x128xf32> -> vector<1x2x128xf32>
    %15 = vector.broadcast %14 : vector<1x2x128xf32> to vector<4x2x128xf32>
    %16 = arith.mulf %11, %15 : vector<4x2x128xf32>
    %17 = math.log %13 : vector<1x2x128xf32>
    %18 = vector.broadcast %17 : vector<1x2x128xf32> to vector<4x2x128xf32>
    %19 = arith.subf %10, %18 : vector<4x2x128xf32>
    %20 = tpu.iota {dimensions = array<i32: 0>} : vector<4x2x128xi32>
    %21 = vector.shape_cast %6 : vector<2x128xi32> to vector<1x2x128xi32>
    %22 = vector.broadcast %21 : vector<1x2x128xi32> to vector<4x2x128xi32>
    %23 = arith.cmpi eq, %22, %20 : vector<4x2x128xi32>
    %24 = arith.extui %23 : vector<4x2x128xi1> to vector<4x2x128xi32>
    %25 = arith.sitofp %24 : vector<4x2x128xi32> to vector<4x2x128xf32>
    %26 = vector.broadcast %8 : vector<1x2x128xf32> to vector<4x2x128xf32>
    %27 = arith.cmpf oeq, %4, %26 : vector<4x2x128xf32>
    %c4_i32 = arith.constant 4 : i32
    %28 = vector.broadcast %c4_i32 : i32 to vector<4x2x128xi32>
    %29 = arith.select %27, %20, %28 : vector<4x2x128xi1>, vector<4x2x128xi32>
    %cst_8 = arith.constant dense<2147483647> : vector<2x128xi32>
    %30 = vector.multi_reduction <minsi>, %29, %cst_8 [0] : vector<4x2x128xi32> to vector<2x128xi32>
    %31 = vector.shape_cast %30 : vector<2x128xi32> to vector<1x2x128xi32>
    %32 = vector.broadcast %31 : vector<1x2x128xi32> to vector<4x2x128xi32>
    %33 = arith.cmpi eq, %32, %20 : vector<4x2x128xi32>
    %34 = arith.extui %33 : vector<4x2x128xi1> to vector<4x2x128xi32>
    %35 = arith.sitofp %34 : vector<4x2x128xi32> to vector<4x2x128xf32>
    %36 = arith.mulf %16, %25 : vector<4x2x128xf32>
    %cst_9 = arith.constant dense<0.000000e+00> : vector<4x128xf32>
    %37 = vector.multi_reduction <add>, %36, %cst_9 [1] : vector<4x2x128xf32> to vector<4x128xf32>
    %cst_10 = arith.constant dense<0.000000e+00> : vector<4x128xf32>
    %38 = vector.multi_reduction <add>, %16, %cst_10 [1] : vector<4x2x128xf32> to vector<4x128xf32>
    %cst_11 = arith.constant dense<0.000000e+00> : vector<4x128xf32>
    %39 = vector.multi_reduction <add>, %25, %cst_11 [1] : vector<4x2x128xf32> to vector<4x128xf32>
    %40 = arith.mulf %35, %25 : vector<4x2x128xf32>
    %cst_12 = arith.constant dense<0.000000e+00> : vector<4x128xf32>
    %41 = vector.multi_reduction <add>, %40, %cst_12 [1] : vector<4x2x128xf32> to vector<4x128xf32>
    %cst_13 = arith.constant dense<0.000000e+00> : vector<4x128xf32>
    %42 = vector.multi_reduction <add>, %35, %cst_13 [1] : vector<4x2x128xf32> to vector<4x128xf32>
    %43 = arith.mulf %19, %25 : vector<4x2x128xf32>
    %cst_14 = arith.constant dense<0.000000e+00> : vector<4x128xf32>
    %44 = vector.multi_reduction <add>, %43, %cst_14 [1] : vector<4x2x128xf32> to vector<4x128xf32>
    %cst_15 = arith.constant 0.000000e+00 : f32
    %45 = vector.broadcast %cst_15 : f32 to vector<4x128xf32>
    %46 = arith.subf %45, %44 : vector<4x128xf32>
    %c0_16 = arith.constant 0 : index
    %c0_17 = arith.constant 0 : index
    %c0_18 = arith.constant 0 : index
    %c0_19 = arith.constant 0 : index
    %47 = vector.load %arg4[%c0_16, %c0_17, %c0_18, %c0_19] : memref<1x6x4x128xf32, #tpu.memory_space<vmem>>, vector<1x1x4x128xf32>
    %48 = vector.shape_cast %47 : vector<1x1x4x128xf32> to vector<4x128xf32>
    %49 = arith.addf %48, %37 : vector<4x128xf32>
    %c0_20 = arith.constant 0 : index
    %c0_21 = arith.constant 0 : index
    %c0_22 = arith.constant 0 : index
    %c0_23 = arith.constant 0 : index
    %50 = vector.load %arg4[%c0_20, %c0_21, %c0_22, %c0_23] : memref<1x6x4x128xf32, #tpu.memory_space<vmem>>, vector<1x1x4x128xf32>
    %51 = vector.shape_cast %50 : vector<1x1x4x128xf32> to vector<4x128xf32>
    %52 = vector.shape_cast %49 : vector<4x128xf32> to vector<1x1x4x128xf32>
    tpu.vector_store %arg4[%c0_20, %c0_21, %c0_22, %c0_23], %52 {strides = array<i32>} : memref<1x6x4x128xf32, #tpu.memory_space<vmem>>, vector<1x1x4x128xf32>,
    %c0_24 = arith.constant 0 : index
    %c1 = arith.constant 1 : index
    %c0_25 = arith.constant 0 : index
    %c0_26 = arith.constant 0 : index
    %53 = vector.load %arg4[%c0_24, %c1, %c0_25, %c0_26] : memref<1x6x4x128xf32, #tpu.memory_space<vmem>>, vector<1x1x4x128xf32>
    %54 = vector.shape_cast %53 : vector<1x1x4x128xf32> to vector<4x128xf32>
    %55 = arith.addf %54, %38 : vector<4x128xf32>
    %c0_27 = arith.constant 0 : index
    %c1_28 = arith.constant 1 : index
    %c0_29 = arith.constant 0 : index
    %c0_30 = arith.constant 0 : index
    %56 = vector.load %arg4[%c0_27, %c1_28, %c0_29, %c0_30] : memref<1x6x4x128xf32, #tpu.memory_space<vmem>>, vector<1x1x4x128xf32>
    %57 = vector.shape_cast %56 : vector<1x1x4x128xf32> to vector<4x128xf32>
    %58 = vector.shape_cast %55 : vector<4x128xf32> to vector<1x1x4x128xf32>
    tpu.vector_store %arg4[%c0_27, %c1_28, %c0_29, %c0_30], %58 {strides = array<i32>} : memref<1x6x4x128xf32, #tpu.memory_space<vmem>>, vector<1x1x4x128xf32>,
    %c0_31 = arith.constant 0 : index
    %c2 = arith.constant 2 : index
    %c0_32 = arith.constant 0 : index
    %c0_33 = arith.constant 0 : index
    %59 = vector.load %arg4[%c0_31, %c2, %c0_32, %c0_33] : memref<1x6x4x128xf32, #tpu.memory_space<vmem>>, vector<1x1x4x128xf32>
    %60 = vector.shape_cast %59 : vector<1x1x4x128xf32> to vector<4x128xf32>
    %61 = arith.addf %60, %39 : vector<4x128xf32>
    %c0_34 = arith.constant 0 : index
    %c2_35 = arith.constant 2 : index
    %c0_36 = arith.constant 0 : index
    %c0_37 = arith.constant 0 : index
    %62 = vector.load %arg4[%c0_34, %c2_35, %c0_36, %c0_37] : memref<1x6x4x128xf32, #tpu.memory_space<vmem>>, vector<1x1x4x128xf32>
    %63 = vector.shape_cast %62 : vector<1x1x4x128xf32> to vector<4x128xf32>
    %64 = vector.shape_cast %61 : vector<4x128xf32> to vector<1x1x4x128xf32>
    tpu.vector_store %arg4[%c0_34, %c2_35, %c0_36, %c0_37], %64 {strides = array<i32>} : memref<1x6x4x128xf32, #tpu.memory_space<vmem>>, vector<1x1x4x128xf32>,
    %c0_38 = arith.constant 0 : index
    %c3 = arith.constant 3 : index
    %c0_39 = arith.constant 0 : index
    %c0_40 = arith.constant 0 : index
    %65 = vector.load %arg4[%c0_38, %c3, %c0_39, %c0_40] : memref<1x6x4x128xf32, #tpu.memory_space<vmem>>, vector<1x1x4x128xf32>
    %66 = vector.shape_cast %65 : vector<1x1x4x128xf32> to vector<4x128xf32>
    %67 = arith.addf %66, %41 : vector<4x128xf32>
    %c0_41 = arith.constant 0 : index
    %c3_42 = arith.constant 3 : index
    %c0_43 = arith.constant 0 : index
    %c0_44 = arith.constant 0 : index
    %68 = vector.load %arg4[%c0_41, %c3_42, %c0_43, %c0_44] : memref<1x6x4x128xf32, #tpu.memory_space<vmem>>, vector<1x1x4x128xf32>
    %69 = vector.shape_cast %68 : vector<1x1x4x128xf32> to vector<4x128xf32>
    %70 = vector.shape_cast %67 : vector<4x128xf32> to vector<1x1x4x128xf32>
    tpu.vector_store %arg4[%c0_41, %c3_42, %c0_43, %c0_44], %70 {strides = array<i32>} : memref<1x6x4x128xf32, #tpu.memory_space<vmem>>, vector<1x1x4x128xf32>,
    %c0_45 = arith.constant 0 : index
    %c4 = arith.constant 4 : index
    %c0_46 = arith.constant 0 : index
    %c0_47 = arith.constant 0 : index
    %71 = vector.load %arg4[%c0_45, %c4, %c0_46, %c0_47] : memref<1x6x4x128xf32, #tpu.memory_space<vmem>>, vector<1x1x4x128xf32>
    %72 = vector.shape_cast %71 : vector<1x1x4x128xf32> to vector<4x128xf32>
    %73 = arith.addf %72, %42 : vector<4x128xf32>
    %c0_48 = arith.constant 0 : index
    %c4_49 = arith.constant 4 : index
    %c0_50 = arith.constant 0 : index
    %c0_51 = arith.constant 0 : index
    %74 = vector.load %arg4[%c0_48, %c4_49, %c0_50, %c0_51] : memref<1x6x4x128xf32, #tpu.memory_space<vmem>>, vector<1x1x4x128xf32>
    %75 = vector.shape_cast %74 : vector<1x1x4x128xf32> to vector<4x128xf32>
    %76 = vector.shape_cast %73 : vector<4x128xf32> to vector<1x1x4x128xf32>
    tpu.vector_store %arg4[%c0_48, %c4_49, %c0_50, %c0_51], %76 {strides = array<i32>} : memref<1x6x4x128xf32, #tpu.memory_space<vmem>>, vector<1x1x4x128xf32>,
    %c0_52 = arith.constant 0 : index
    %c5 = arith.constant 5 : index
    %c0_53 = arith.constant 0 : index
    %c0_54 = arith.constant 0 : index
    %77 = vector.load %arg4[%c0_52, %c5, %c0_53, %c0_54] : memref<1x6x4x128xf32, #tpu.memory_space<vmem>>, vector<1x1x4x128xf32>
    %78 = vector.shape_cast %77 : vector<1x1x4x128xf32> to vector<4x128xf32>
    %79 = arith.addf %78, %46 : vector<4x128xf32>
    %c0_55 = arith.constant 0 : index
    %c5_56 = arith.constant 5 : index
    %c0_57 = arith.constant 0 : index
    %c0_58 = arith.constant 0 : index
    %80 = vector.load %arg4[%c0_55, %c5_56, %c0_57, %c0_58] : memref<1x6x4x128xf32, #tpu.memory_space<vmem>>, vector<1x1x4x128xf32>
    %81 = vector.shape_cast %80 : vector<1x1x4x128xf32> to vector<4x128xf32>
    %82 = vector.shape_cast %79 : vector<4x128xf32> to vector<1x1x4x128xf32>
    tpu.vector_store %arg4[%c0_55, %c5_56, %c0_57, %c0_58], %82 {strides = array<i32>} : memref<1x6x4x128xf32, #tpu.memory_space<vmem>>, vector<1x1x4x128xf32>,
    return
  }
  func.func @transform_0(%arg0: i32, %arg1: i32) -> (i32, i32, i32, i32) {
    %c0_i32 = arith.constant 0 : i32
    %c0_i32_0 = arith.constant 0 : i32
    %c0_i32_1 = arith.constant 0 : i32
    return %arg0, %c0_i32, %arg1, %c0_i32_0 : i32, i32, i32, i32
  }
  func.func @transform_1(%arg0: i32, %arg1: i32) -> (i32, i32, i32) {
    %c0_i32 = arith.constant 0 : i32
    %c0_i32_0 = arith.constant 0 : i32
    return %arg0, %arg1, %c0_i32 : i32, i32, i32
  }
  func.func @transform_2(%arg0: i32, %arg1: i32) -> (i32, i32, i32, i32) {
    %c0_i32 = arith.constant 0 : i32
    %c0_i32_0 = arith.constant 0 : i32
    %c0_i32_1 = arith.constant 0 : i32
    %c0_i32_2 = arith.constant 0 : i32
    return %arg0, %c0_i32, %c0_i32_0, %c0_i32_1 : i32, i32, i32, i32
  }
}

</mosaic_0001>

<llo_original>
// kernel: squeeze.12
$region0: #{squeeze.12}
  %s0 = inlined_call_operand.vmem [shape: f32[1,4,128], index: 0, kind: input, shape index: {}]
  %s1 = inlined_call_operand.vmem [shape: f32[4,8,16], index: 1, kind: output, shape index: {}]
  $region1: #{squeeze.12} parent=0
    #allocation0 [shape = 'u8[4096]{0}', space=vmem, size = 0x1000, scoped, tag = 'scoped mem for input reshape']
    %s3 = ssub.s32 16, 1
    %v4 = vld [vmem:[%s0] sm:%s3]
    %5 = vst [vmem:[#allocation0] sm:%s3] %v4
    %v6 = vld [vmem:[#allocation0] sm:$0xf]
    %vm7 = vcmask 130048
    %8 = vst.msk [vmem:[%s1] ss:$8 sm:$0xf] %vm7, %v6
    %v9 = vld [vmem:[#allocation0] sm:$0xf]
    %10 = vrot.lane.b32.xlu0 %v9, 112
    %v11 = vpop.permute.xlu0 %10
    %vm12 = vcmask 130048
    %s13 = scalar_lea.vmem %s1, 1
    %14 = vst.msk [vmem:[%s13] ss:$8 sm:$0xf] %vm12, %v11
    %v15 = vld [vmem:[#allocation0] sm:$0xf]
    %16 = vrot.lane.b32.xlu0 %v15, 96
    %v17 = vpop.permute.xlu0 %16
    %vm18 = vcmask 130048
    %s19 = scalar_lea.vmem %s1, 2
    %20 = vst.msk [vmem:[%s19] ss:$8 sm:$0xf] %vm18, %v17
    %v21 = vld [vmem:[#allocation0] sm:$0xf]
    %22 = vrot.lane.b32.xlu0 %v21, 80
    %v23 = vpop.permute.xlu0 %22
    %vm24 = vcmask 130048
    %s25 = scalar_lea.vmem %s1, 3
    %26 = vst.msk [vmem:[%s25] ss:$8 sm:$0xf] %vm24, %v23
    %v27 = vld [vmem:[#allocation0] sm:$0xf]
    %28 = vrot.lane.b32.xlu0 %v27, 64
    %v29 = vpop.permute.xlu0 %28
    %vm30 = vcmask 130048
    %s31 = scalar_lea.vmem %s1, 4
    %32 = vst.msk [vmem:[%s31] ss:$8 sm:$0xf] %vm30, %v29
    %v33 = vld [vmem:[#allocation0] sm:$0xf]
    %34 = vrot.lane.b32.xlu0 %v33, 48
    %v35 = vpop.permute.xlu0 %34
    %vm36 = vcmask 130048
    %s37 = scalar_lea.vmem %s1, 5
    %38 = vst.msk [vmem:[%s37] ss:$8 sm:$0xf] %vm36, %v35
    %v39 = vld [vmem:[#allocation0] sm:$0xf]
    %40 = vrot.lane.b32.xlu0 %v39, 32
    %v41 = vpop.permute.xlu0 %40
    %vm42 = vcmask 130048
    %s43 = scalar_lea.vmem %s1, 6
    %44 = vst.msk [vmem:[%s43] ss:$8 sm:$0xf] %vm42, %v41
    %v45 = vld [vmem:[#allocation0] sm:$0xf]
    %46 = vrot.lane.b32.xlu0 %v45, 16
    %v47 = vpop.permute.xlu0 %46
    %vm48 = vcmask 130048
    %s49 = scalar_lea.vmem %s1, 7
    %50 = vst.msk [vmem:[%s49] ss:$8 sm:$0xf] %vm48, %v47

// kernel: tversky_ce_dice_loss.1
$region0: #{tversky_ce_dice_loss.1}
  #allocation0 [shape = 'u32[]', space=smem, size = 0x4, offset = 0x4, fixed_abs, tag = 'smem constant byte address 0x4 - core index']
  #allocation1 [shape = 'u32[72,128]{1,0:T(1,128)}', space=vmem, size = 0x9000, scoped, tag = 'internal scratch']
  %s0 = inlined_call_operand.vmem [shape: f32[2,4,2,128], index: 0, kind: input, shape index: {}]
  %s1 = inlined_call_operand.vmem [shape: s32[2,2,128], index: 1, kind: input, shape index: {}]
  %s2 = inlined_call_operand.vmem [shape: f32[2,6,4,128], index: 2, kind: output, shape index: {}]
  %s3 = sld [smem:[#allocation0]]
  $region45: #{tversky_ce_dice_loss.1} parent=0
    _
  %s5 = ssub.s32 1, %s3
  %s6 = scalar_select 0, %s5, %s3
  loop: start=0, step=1, limit=4
  $region2: #{tversky_ce_dice_loss.1} parent=0 // loop_pre_header
    _
  $region3: #{tversky_ce_dice_loss.1} parent=0 // loop_header
    %s8 = sphi 0, %s12
    %p9 = scmp.ge.s32.totalorder %s8, 4
    %s15 = sphi 0, %s27
    %s16 = sphi 0, %s23
    %s17 = sphi 0, %s15
    %s18 = sphi 0, %s16
    %s19 = sphi 0, %s17
    %s20 = sphi 0, %s18
    %s32 = sphi 0, %s34
    %s35 = sphi 0, %s32
    %s36 = sphi 0, %s35
    %s52 = sphi 0, %s36
    %s60 = sphi 0, %s62
    %s63 = sphi 0, %s60
    %s64 = sphi 0, %s63
    %s80 = sphi 0, %s64
    %s86 = sphi 0, %s88
    %s89 = sphi 0, %s86
    %s90 = sphi 0, %s89
    %s106 = sphi 0, %s90
  $region4: #{tversky_ce_dice_loss.1} parent=0 // loop_header_branch
    %11 = sbr.rel (%p9) target = $region8
  $region5: #{tversky_ce_dice_loss.1} parent=0 // loop_body
    %s13 = ssub.s32 %s8, 1
    %s14 = ssub.s32 %s8, 2
    %s21 = sadd.s32 1, %s16
    %p22 = scmp.ge.s32.totalorder %s21, 1
    %s23 = scalar_select %p22, 0, %s21
    %s24 = sadd.s32 1, %s15
    %s25 = scalar_select %p22, %s24, %s15
    %p26 = scmp.ge.s32.totalorder %s25, 2
    %s27 = scalar_select %p26, 0, %s25
    %s28 = ssub.s32 %s15, %s27
    %s29 = ssub.s32 %s16, %s23
    %s30 = sor.u32 %s28, %s29
    %p31 = scmp.eq.s32.totalorder %s30, 0
    %s33 = sadd.s32 %s32, 1
    %s34 = scalar_select %p31, %s32, %s33
    %p37 = pneg %p31
    %p38 = scmp.eq.s32.totalorder %s8, 1
    %p39 = por %p37, %p38
    %p40 = scmp.ne.s32.totalorder %s32, %s35
    %p41 = scmp.eq.s32.totalorder %s8, 0
    %p42 = por %p40, %p41
    %p43 = scmp.ne.s32.totalorder %s32, %s35
    %p44 = scmp.eq.s32.totalorder %s13, 1
    %p45 = por %p43, %p44
    %p46 = scmp.ne.s32.totalorder %s35, %s36
    %p47 = scmp.eq.s32.totalorder %s13, 0
    %p48 = por %p46, %p47
    %p49 = scmp.ne.s32.totalorder %s35, %s36
    %p50 = scmp.eq.s32.totalorder %s14, 1
    %p51 = por %p49, %p50
    %p53 = scmp.ne.s32.totalorder %s36, %s52
    %p54 = scmp.eq.s32.totalorder %s14, 0
    %p55 = por %p53, %p54
    %s56 = ssub.s32 %s15, %s27
    %s57 = ssub.s32 %s16, %s23
    %s58 = sor.u32 %s56, %s57
    %p59 = scmp.eq.s32.totalorder %s58, 0
    %s61 = sadd.s32 %s60, 1
    %s62 = scalar_select %p59, %s60, %s61
    %p65 = pneg %p59
    %p66 = scmp.eq.s32.totalorder %s8, 1
    %p67 = por %p65, %p66
    %p68 = scmp.ne.s32.totalorder %s60, %s63
    %p69 = scmp.eq.s32.totalorder %s8, 0
    %p70 = por %p68, %p69
    %p71 = scmp.ne.s32.totalorder %s60, %s63
    %p72 = scmp.eq.s32.totalorder %s13, 1
    %p73 = por %p71, %p72
    %p74 = scmp.ne.s32.totalorder %s63, %s64
    %p75 = scmp.eq.s32.totalorder %s13, 0
    %p76 = por %p74, %p75
    %p77 = scmp.ne.s32.totalorder %s63, %s64
    %p78 = scmp.eq.s32.totalorder %s14, 1
    %p79 = por %p77, %p78
    %p81 = scmp.ne.s32.totalorder %s64, %s80
    %p82 = scmp.eq.s32.totalorder %s14, 0
    %p83 = por %p81, %p82
    %s84 = ssub.s32 %s15, %s27
    %p85 = scmp.eq.s32.totalorder %s84, 0
    %s87 = sadd.s32 %s86, 1
    %s88 = scalar_select %p85, %s86, %s87
    %p91 = pneg %p85
    %p92 = scmp.eq.s32.totalorder %s8, 1
    %p93 = por %p91, %p92
    %p94 = scmp.ne.s32.totalorder %s86, %s89
    %p95 = scmp.eq.s32.totalorder %s8, 0
    %p96 = por %p94, %p95
    %p97 = scmp.ne.s32.totalorder %s86, %s89
    %p98 = scmp.eq.s32.totalorder %s13, 1
    %p99 = por %p97, %p98
    %p100 = scmp.ne.s32.totalorder %s89, %s90
    %p101 = scmp.eq.s32.totalorder %s13, 0
    %p102 = por %p100, %p101
    %p103 = scmp.ne.s32.totalorder %s89, %s90
    %p104 = scmp.eq.s32.totalorder %s14, 1
    %p105 = por %p103, %p104
    %p107 = scmp.ne.s32.totalorder %s90, %s106
    %p108 = scmp.eq.s32.totalorder %s14, 0
    %p109 = por %p107, %p108
    %p110 = scmp.le.s32.totalorder 1, %s8
    %p111 = scmp.lt.s32.totalorder %s8, 3
    %p112 = pnand %p110, %p111
    %p113 = pneg %p112
    // Predicated region
    $region9: #{tversky_ce_dice_loss.1} parent=5 // pred_check
      _
    $region10: #{tversky_ce_dice_loss.1} parent=5 // pred_check_branch
      %115 = sbr.rel (%p112) target = $region12
    $region11: #{tversky_ce_dice_loss.1} parent=5 // pred_region
      %s116 = ssub.s32 %s8, 1
    $region12: #{tversky_ce_dice_loss.1} parent=5 // pred_fallthru
      _
    %p117 = scmp.lt.s32.totalorder %s8, 2
    // Predicated region
    $region13: #{tversky_ce_dice_loss.1} parent=5 // pred_check
      %p118 = pneg %p117
    $region14: #{tversky_ce_dice_loss.1} parent=5 // pred_check_branch
      %120 = sbr.rel (%p118) target = $region16
    $region15: #{tversky_ce_dice_loss.1} parent=5 // pred_region
      // Predicated region
      $region17: #{tversky_ce_dice_loss.1} parent=15 // pred_check
        %p121 = pneg %p42
      $region18: #{tversky_ce_dice_loss.1} parent=15 // pred_check_branch
        %123 = sbr.rel (%p121) target = $region20
      $region19: #{tversky_ce_dice_loss.1} parent=15 // pred_region
        %p124 = scmp.lt.s32.totalorder %s15, 1
        %s125 = scalar_select %p124, %s15, 1
        %p126 = scmp.lt.s32.totalorder %s16, 0
        %s127 = scalar_select %p126, %s16, 0
        %s128 = smul.addr %s125, 4
        %s129 = sadd.s32 %s127, %s128
        %s130 = smul.addr %s129, 2
        %s131 = scalar_lea.vmem %s0, %s130
      $region20: #{tversky_ce_dice_loss.1} parent=15 // pred_fallthru
        _
      // Predicated region
      $region21: #{tversky_ce_dice_loss.1} parent=15 // pred_check
        %p132 = pneg %p70
      $region22: #{tversky_ce_dice_loss.1} parent=15 // pred_check_branch
        %134 = sbr.rel (%p132) target = $region24
      $region23: #{tversky_ce_dice_loss.1} parent=15 // pred_region
        %p135 = scmp.lt.s32.totalorder %s15, 1
        %s136 = scalar_select %p135, %s15, 1
        %p137 = scmp.lt.s32.totalorder %s16, 0
        %s138 = scalar_select %p137, %s16, 0
        %s139 = sadd.s32 %s138, %s136
        %s140 = smul.addr %s139, 2
        %s141 = scalar_lea.vmem %s1, %s140
      $region24: #{tversky_ce_dice_loss.1} parent=15 // pred_fallthru
        _
    $region16: #{tversky_ce_dice_loss.1} parent=5 // pred_fallthru
      _
    %p142 = scmp.le.s32.totalorder 1, %s8
    %p143 = scmp.lt.s32.totalorder %s8, 3
    %p144 = pnand %p142, %p143
    %p145 = pneg %p144
    // Predicated region
    $region25: #{tversky_ce_dice_loss.1} parent=5 // pred_check
      _
    $region26: #{tversky_ce_dice_loss.1} parent=5 // pred_check_branch
      %147 = sbr.rel (%p144) target = $region28
    $region27: #{tversky_ce_dice_loss.1} parent=5 // pred_region
      %s148 = ssub.s32 %s8, 1
      %p149 = scmp.lt.s32.totalorder %s17, 1
      %s150 = scalar_select %p149, %s17, 1
      %p151 = scmp.lt.s32.totalorder %s18, 0
      %s152 = scalar_select %p151, %s18, 0
      %s153 = smul.addr %s150, 4
      %s154 = sadd.s32 %s152, %s153
      %s155 = smul.addr %s154, 2
      %s156 = scalar_lea.vmem %s0, %s155
      %p157 = pneg %p48
      %p158 = pneg %p45
      %p159 = scmp.lt.s32.totalorder %s17, 1
      %s160 = scalar_select %p159, %s17, 1
      %p161 = scmp.lt.s32.totalorder %s18, 0
      %s162 = scalar_select %p161, %s18, 0
      %s163 = sadd.s32 %s162, %s160
      %s164 = smul.addr %s163, 2
      %s165 = scalar_lea.vmem %s1, %s164
      %p166 = pneg %p76
      %p167 = pneg %p73
      %p168 = pneg %p102
      %p169 = pneg %p99
      %p170 = scmp.lt.s32.totalorder %s17, 1
      %s171 = scalar_select %p170, %s17, 1
      %s172 = smul.addr %s171, 6
      %s173 = smul.addr %s172, 4
      %s174 = scalar_lea.vmem %s2, %s173
      %p175 = scmp.lt.s32.totalorder %s17, 1
      %s176 = scalar_select %p175, %s17, 1
      %p177 = scmp.lt.s32.totalorder %s18, 0
      %s178 = scalar_select %p177, %s18, 0
      %s179 = smul.addr %s176, 4
      %s180 = sadd.s32 %s178, %s179
      %s181 = smul.addr %s180, 2
      %s182 = scalar_lea.vmem %s0, %s181
      %p183 = scmp.lt.s32.totalorder %s17, 1
      %s184 = scalar_select %p183, %s17, 1
      %p185 = scmp.lt.s32.totalorder %s18, 0
      %s186 = scalar_select %p185, %s18, 0
      %s187 = sadd.s32 %s186, %s184
      %s188 = smul.addr %s187, 2
      %s189 = scalar_lea.vmem %s1, %s188
      %p190 = scmp.lt.s32.totalorder %s17, 1
      %s191 = scalar_select %p190, %s17, 1
      %s192 = smul.addr %s191, 6
      %s193 = smul.addr %s192, 4
      %s194 = scalar_lea.vmem %s2, %s193
      %p195 = scmp.eq.s32.totalorder %s18, 0
      // Predicated region
      $region29: #{tversky_ce_dice_loss.1} parent=27 // pred_check
        %p196 = pneg %p195
      $region30: #{tversky_ce_dice_loss.1} parent=27 // pred_check_branch
        %198 = sbr.rel (%p196) target = $region32
      $region31: #{tversky_ce_dice_loss.1} parent=27 // pred_region
        %199 = vst [vmem:[%s194] sm:$0xf] 0.0
        %200 = vst [vmem:[%s194 + $0x4] sm:$0xf] 0.0
        %201 = vst [vmem:[%s194 + $0x8] sm:$0xf] 0.0
        %202 = vst [vmem:[%s194 + $0xc] sm:$0xf] 0.0
        %203 = vst [vmem:[%s194 + $0x10] sm:$0xf] 0.0
        %204 = vst [vmem:[%s194 + $0x14] sm:$0xf] 0.0
      $region32: #{tversky_ce_dice_loss.1} parent=27 // pred_fallthru
        _
      %v205 = vld [vmem:[%s182] sm:$0x3]
      %v206 = vld [vmem:[%s182 + $0x2] sm:$0x3]
      %v207 = vld [vmem:[%s182 + $0x4] sm:$0x3]
      %v208 = vld [vmem:[%s182 + $0x6] sm:$0x3]
      %v209 = vld [vmem:[%s189] sm:$0x3]
      %vm210 = vcmask 1041408
      %v211 = vsel %vm210, %v205, -inf
      %v212 = vsel %vm210, %v206, -inf
      %v213 = vsel %vm210, %v207, -inf
      %v214 = vsel %vm210, %v208, -inf
      %v215 = vmax.f32 %v211, %v212
      %v216 = vmax.f32 %v213, %v214
      %v217 = vmax.f32 %v215, %v216
      %v218 = vsub.f32 %v205, %v217
      %v219 = vsub.f32 %v206, %v217
      %v220 = vsub.f32 %v207, %v217
      %v221 = vsub.f32 %v208, %v217
      %v222 = vmul.f32 %v218, 1.442695
      %v223 = vpow.pop %v222
      %v224 = vmul.f32 %v219, 1.442695
      %v225 = vpow.pop %v224
      %v226 = vmul.f32 %v220, 1.442695
      %v227 = vpow.pop %v226
      %v228 = vmul.f32 %v221, 1.442695
      %v229 = vpow.pop %v228
      %v230 = vsel %vm210, %v223, 0.0
      %v231 = vsel %vm210, %v225, 0.0
      %v232 = vadd.f32 %v230, %v231
      %v233 = vsel %vm210, %v227, 0.0
      %v234 = vadd.f32 %v232, %v233
      %v235 = vsel %vm210, %v229, 0.0
      %v236 = vadd.f32 %v234, %v235
      %v237 = vrcp.pop %v236
      %v238 = vmul.f32 %v236, %v237
      %v239 = vsub.f32 1.0, %v238
      %v240 = vmul.f32 %v237, %v239
      %v241 = vadd.f32 %v237, %v240
      %vm242 = vweird.f32 %v236
      %vm243 = vweird.f32 %v237
      %vm244 = vmor %vm242, %vm243
      %v245 = vsel %vm244, %v237, %v241
      %v246 = vand.u32 2147483647, %v236
      %vm247 = vcmp.eq.f32.partialorder %v246, 8.507059e+37
      %v248 = vand.u32 %v236, 2147483648
      %v249 = vor.u32 1.1754944e-38, %v248
      %v250 = vsel %vm247, %v249, %v245
      %v251 = vmul.f32 %v223, %v250
      %v252 = vmul.f32 %v225, %v250
      %v253 = vmul.f32 %v227, %v250
      %v254 = vmul.f32 %v229, %v250
      %v255 = vlog2.pop %v236
      %v256 = vmul.f32 %v255, 0.6931472
      %v257 = vsub.f32 %v218, %v256
      %v258 = vsub.f32 %v219, %v256
      %v259 = vsub.f32 %v220, %v256
      %v260 = vsub.f32 %v221, %v256
      %vm261 = vcmp.eq.s32.totalorder %v209, 0
      %vm262 = vcmp.eq.s32.totalorder %v209, 1
      %vm263 = vcmp.eq.s32.totalorder %v209, 2
      %vm264 = vcmp.eq.s32.totalorder %v209, 3
      %v265 = vsel %vm261, 1, 0
      %v266 = vsel %vm262, 1, 0
      %v267 = vsel %vm263, 1, 0
      %v268 = vsel %vm264, 1, 0
      %v269 = vcvt.s32.f32 %v265
      %v270 = vcvt.s32.f32 %v266
      %v271 = vcvt.s32.f32 %v267
      %v272 = vcvt.s32.f32 %v268
      %vm273 = vcmp.eq.f32.partialorder %v205, %v217
      %vm274 = vcmp.eq.f32.partialorder %v206, %v217
      %vm275 = vcmp.eq.f32.partialorder %v207, %v217
      %vm276 = vcmp.eq.f32.partialorder %v208, %v217
      %v277 = vsel %vm273, 0, 4
      %v278 = vsel %vm274, 1, 4
      %v279 = vsel %vm275, 2, 4
      %v280 = vsel %vm276, 3, 4
      %v281 = vsel %vm210, %v277, 2147483647
      %v282 = vsel %vm210, %v278, 2147483647
      %v283 = vsel %vm210, %v279, 2147483647
      %v284 = vsel %vm210, %v280, 2147483647
      %vm285 = vcmp.lt.s32.totalorder %v281, %v282
      %v286 = vsel %vm285, %v281, %v282
      %vm287 = vcmp.lt.s32.totalorder %v283, %v284
      %v288 = vsel %vm287, %v283, %v284
      %vm289 = vcmp.lt.s32.totalorder %v286, %v288
      %v290 = vsel %vm289, %v286, %v288
      %vm291 = vcmp.eq.s32.totalorder %v290, 0
      %vm292 = vcmp.eq.s32.totalorder %v290, 1
      %vm293 = vcmp.eq.s32.totalorder %v290, 2
      %vm294 = vcmp.eq.s32.totalorder %v290, 3
      %v295 = vsel %vm291, 1, 0
      %v296 = vsel %vm292, 1, 0
      %v297 = vsel %vm293, 1, 0
      %v298 = vsel %vm294, 1, 0
      %v299 = vcvt.s32.f32 %v295
      %v300 = vcvt.s32.f32 %v296
      %v301 = vcvt.s32.f32 %v297
      %v302 = vcvt.s32.f32 %v298
      %v303 = vmul.f32 %v251, %v269
      %v304 = vmul.f32 %v252, %v270
      %v305 = vmul.f32 %v253, %v271
      %v306 = vmul.f32 %v254, %v272
      %v307 = vsel %vm210, %v303, 0.0
      %v308 = vrot.slane %v307, 4
      %v309 = vadd.f32 %v307, %v308
      %v310 = vrot.slane %v309, 2
      %v311 = vadd.f32 %v309, %v310
      %v312 = vrot.slane %v311, 1
      %v313 = vadd.f32 %v311, %v312
      %v314 = vsel %vm210, %v304, 0.0
      %v315 = vrot.slane %v314, 4
      %v316 = vadd.f32 %v314, %v315
      %v317 = vrot.slane %v316, 2
      %v318 = vadd.f32 %v316, %v317
      %v319 = vrot.slane %v318, 1
      %v320 = vadd.f32 %v318, %v319
      %v321 = vsel %vm210, %v305, 0.0
      %v322 = vrot.slane %v321, 4
      %v323 = vadd.f32 %v321, %v322
      %v324 = vrot.slane %v323, 2
      %v325 = vadd.f32 %v323, %v324
      %v326 = vrot.slane %v325, 1
      %v327 = vadd.f32 %v325, %v326
      %v328 = vsel %vm210, %v306, 0.0
      %v329 = vrot.slane %v328, 4
      %v330 = vadd.f32 %v328, %v329
      %v331 = vrot.slane %v330, 2
      %v332 = vadd.f32 %v330, %v331
      %v333 = vrot.slane %v332, 1
      %v334 = vadd.f32 %v332, %v333
      %v335 = vsel %vm210, %v251, 0.0
      %v336 = vrot.slane %v335, 4
      %v337 = vadd.f32 %v335, %v336
      %v338 = vrot.slane %v337, 2
      %v339 = vadd.f32 %v337, %v338
      %v340 = vrot.slane %v339, 1
      %v341 = vadd.f32 %v339, %v340
      %v342 = vsel %vm210, %v252, 0.0
      %v343 = vrot.slane %v342, 4
      %v344 = vadd.f32 %v342, %v343
      %v345 = vrot.slane %v344, 2
      %v346 = vadd.f32 %v344, %v345
      %v347 = vrot.slane %v346, 1
      %v348 = vadd.f32 %v346, %v347
      %v349 = vsel %vm210, %v253, 0.0
      %v350 = vrot.slane %v349, 4
      %v351 = vadd.f32 %v349, %v350
      %v352 = vrot.slane %v351, 2
      %v353 = vadd.f32 %v351, %v352
      %v354 = vrot.slane %v353, 1
      %v355 = vadd.f32 %v353, %v354
      %v356 = vsel %vm210, %v254, 0.0
      %v357 = vrot.slane %v356, 4
      %v358 = vadd.f32 %v356, %v357
      %v359 = vrot.slane %v358, 2
      %v360 = vadd.f32 %v358, %v359
      %v361 = vrot.slane %v360, 1
      %v362 = vadd.f32 %v360, %v361
      %v363 = vsel %vm210, %v269, 0.0
      %v364 = vrot.slane %v363, 4
      %v365 = vadd.f32 %v363, %v364
      %v366 = vrot.slane %v365, 2
      %v367 = vadd.f32 %v365, %v366
      %v368 = vrot.slane %v367, 1
      %v369 = vadd.f32 %v367, %v368
      %v370 = vsel %vm210, %v270, 0.0
      %v371 = vrot.slane %v370, 4
      %v372 = vadd.f32 %v370, %v371
      %v373 = vrot.slane %v372, 2
      %v374 = vadd.f32 %v372, %v373
      %v375 = vrot.slane %v374, 1
      %v376 = vadd.f32 %v374, %v375
      %v377 = vsel %vm210, %v271, 0.0
      %v378 = vrot.slane %v377, 4
      %v379 = vadd.f32 %v377, %v378
      %v380 = vrot.slane %v379, 2
      %v381 = vadd.f32 %v379, %v380
      %v382 = vrot.slane %v381, 1
      %v383 = vadd.f32 %v381, %v382
      %v384 = vsel %vm210, %v272, 0.0
      %v385 = vrot.slane %v384, 4
      %v386 = vadd.f32 %v384, %v385
      %v387 = vrot.slane %v386, 2
      %v388 = vadd.f32 %v386, %v387
      %v389 = vrot.slane %v388, 1
      %v390 = vadd.f32 %v388, %v389
      %v391 = vmul.f32 %v299, %v269
      %v392 = vmul.f32 %v300, %v270
      %v393 = vmul.f32 %v301, %v271
      %v394 = vmul.f32 %v302, %v272
      %v395 = vsel %vm210, %v391, 0.0
      %v396 = vrot.slane %v395, 4
      %v397 = vadd.f32 %v395, %v396
      %v398 = vrot.slane %v397, 2
      %v399 = vadd.f32 %v397, %v398
      %v400 = vrot.slane %v399, 1
      %v401 = vadd.f32 %v399, %v400
      %v402 = vsel %vm210, %v392, 0.0
      %v403 = vrot.slane %v402, 4
      %v404 = vadd.f32 %v402, %v403
      %v405 = vrot.slane %v404, 2
      %v406 = vadd.f32 %v404, %v405
      %v407 = vrot.slane %v406, 1
      %v408 = vadd.f32 %v406, %v407
      %v409 = vsel %vm210, %v393, 0.0
      %v410 = vrot.slane %v409, 4
      %v411 = vadd.f32 %v409, %v410
      %v412 = vrot.slane %v411, 2
      %v413 = vadd.f32 %v411, %v412
      %v414 = vrot.slane %v413, 1
      %v415 = vadd.f32 %v413, %v414
      %v416 = vsel %vm210, %v394, 0.0
      %v417 = vrot.slane %v416, 4
      %v418 = vadd.f32 %v416, %v417
      %v419 = vrot.slane %v418, 2
      %v420 = vadd.f32 %v418, %v419
      %v421 = vrot.slane %v420, 1
      %v422 = vadd.f32 %v420, %v421
      %v423 = vsel %vm210, %v299, 0.0
      %v424 = vrot.slane %v423, 4
      %v425 = vadd.f32 %v423, %v424
      %v426 = vrot.slane %v425, 2
      %v427 = vadd.f32 %v425, %v426
      %v428 = vrot.slane %v427, 1
      %v429 = vadd.f32 %v427, %v428
      %v430 = vsel %vm210, %v300, 0.0
      %v431 = vrot.slane %v430, 4
      %v432 = vadd.f32 %v430, %v431
      %v433 = vrot.slane %v432, 2
      %v434 = vadd.f32 %v432, %v433
      %v435 = vrot.slane %v434, 1
      %v436 = vadd.f32 %v434, %v435
      %v437 = vsel %vm210, %v301, 0.0
      %v438 = vrot.slane %v437, 4
      %v439 = vadd.f32 %v437, %v438
      %v440 = vrot.slane %v439, 2
      %v441 = vadd.f32 %v439, %v440
      %v442 = vrot.slane %v441, 1
      %v443 = vadd.f32 %v441, %v442
      %v444 = vsel %vm210, %v302, 0.0
      %v445 = vrot.slane %v444, 4
      %v446 = vadd.f32 %v444, %v445
      %v447 = vrot.slane %v446, 2
      %v448 = vadd.f32 %v446, %v447
      %v449 = vrot.slane %v448, 1
      %v450 = vadd.f32 %v448, %v449
      %v451 = vmul.f32 %v257, %v269
      %v452 = vmul.f32 %v258, %v270
      %v453 = vmul.f32 %v259, %v271
      %v454 = vmul.f32 %v260, %v272
      %v455 = vsel %vm210, %v451, 0.0
      %v456 = vrot.slane %v455, 4
      %v457 = vadd.f32 %v455, %v456
      %v458 = vrot.slane %v457, 2
      %v459 = vadd.f32 %v457, %v458
      %v460 = vrot.slane %v459, 1
      %v461 = vadd.f32 %v459, %v460
      %v462 = vsel %vm210, %v452, 0.0
      %v463 = vrot.slane %v462, 4
      %v464 = vadd.f32 %v462, %v463
      %v465 = vrot.slane %v464, 2
      %v466 = vadd.f32 %v464, %v465
      %v467 = vrot.slane %v466, 1
      %v468 = vadd.f32 %v466, %v467
      %v469 = vsel %vm210, %v453, 0.0
      %v470 = vrot.slane %v469, 4
      %v471 = vadd.f32 %v469, %v470
      %v472 = vrot.slane %v471, 2
      %v473 = vadd.f32 %v471, %v472
      %v474 = vrot.slane %v473, 1
      %v475 = vadd.f32 %v473, %v474
      %v476 = vsel %vm210, %v454, 0.0
      %v477 = vrot.slane %v476, 4
      %v478 = vadd.f32 %v476, %v477
      %v479 = vrot.slane %v478, 2
      %v480 = vadd.f32 %v478, %v479
      %v481 = vrot.slane %v480, 1
      %v482 = vadd.f32 %v480, %v481
      %v483 = vsub.f32 0.0, %v461
      %v484 = vsub.f32 0.0, %v468
      %v485 = vsub.f32 0.0, %v475
      %v486 = vsub.f32 0.0, %v482
      %v487 = vld [vmem:[%s194] sm:$0xf]
      %vm492 = vcmask 1041409
      %v493 = vsel %vm492, %v320, %v313
      %vm494 = vcmask 1042434
      %v495 = vsel %vm494, %v327, %v493
      %vm496 = vcmask 1043459
      %v497 = vsel %vm496, %v334, %v495
      %v499 = vadd.f32 %v487, %v497
      %500 = vst [vmem:[%s194] sm:$0xf] %v499
      %s501 = scalar_lea.vmem %s194, 4
      %v502 = vld [vmem:[%s501] sm:$0xf]
      %v507 = vsel %vm492, %v348, %v341
      %v508 = vsel %vm494, %v355, %v507
      %v509 = vsel %vm496, %v362, %v508
      %v511 = vadd.f32 %v502, %v509
      %512 = vst [vmem:[%s501] sm:$0xf] %v511
      %s513 = scalar_lea.vmem %s194, 8
      %v514 = vld [vmem:[%s513] sm:$0xf]
      %v519 = vsel %vm492, %v376, %v369
      %v520 = vsel %vm494, %v383, %v519
      %v521 = vsel %vm496, %v390, %v520
      %v523 = vadd.f32 %v514, %v521
      %524 = vst [vmem:[%s513] sm:$0xf] %v523
      %s525 = scalar_lea.vmem %s194, 12
      %v526 = vld [vmem:[%s525] sm:$0xf]
      %v531 = vsel %vm492, %v408, %v401
      %v532 = vsel %vm494, %v415, %v531
      %v533 = vsel %vm496, %v422, %v532
      %v535 = vadd.f32 %v526, %v533
      %536 = vst [vmem:[%s525] sm:$0xf] %v535
      %s537 = scalar_lea.vmem %s194, 16
      %v538 = vld [vmem:[%s537] sm:$0xf]
      %v543 = vsel %vm492, %v436, %v429
      %v544 = vsel %vm494, %v443, %v543
      %v545 = vsel %vm496, %v450, %v544
      %v547 = vadd.f32 %v538, %v545
      %548 = vst [vmem:[%s537] sm:$0xf] %v547
      %s549 = scalar_lea.vmem %s194, 20
      %v550 = vld [vmem:[%s549] sm:$0xf]
      %v555 = vsel %vm492, %v484, %v483
      %v556 = vsel %vm494, %v485, %v555
      %v557 = vsel %vm496, %v486, %v556
      %v559 = vadd.f32 %v550, %v557
      %560 = vst [vmem:[%s549] sm:$0xf] %v559
      %p561 = scmp.lt.s32.totalorder %s17, 1
      %s562 = scalar_select %p561, %s17, 1
      %s563 = smul.addr %s562, 6
      %s564 = smul.addr %s563, 4
      %s565 = scalar_lea.vmem %s2, %s564
      // Predicated region
      $region33: #{tversky_ce_dice_loss.1} parent=27 // pred_check
        %p566 = pneg %p99
      $region34: #{tversky_ce_dice_loss.1} parent=27 // pred_check_branch
        %568 = sbr.rel (%p566) target = $region36
      $region35: #{tversky_ce_dice_loss.1} parent=27 // pred_region
        _
      $region36: #{tversky_ce_dice_loss.1} parent=27 // pred_fallthru
        _
    $region28: #{tversky_ce_dice_loss.1} parent=5 // pred_fallthru
      _
    %p569 = scmp.le.s32.totalorder 2, %s8
    // Predicated region
    $region37: #{tversky_ce_dice_loss.1} parent=5 // pred_check
      %p570 = pneg %p569
    $region38: #{tversky_ce_dice_loss.1} parent=5 // pred_check_branch
      %572 = sbr.rel (%p570) target = $region40
    $region39: #{tversky_ce_dice_loss.1} parent=5 // pred_region
      %s573 = ssub.s32 %s8, 2
      // Predicated region
      $region41: #{tversky_ce_dice_loss.1} parent=39 // pred_check
        %p574 = pneg %p105
      $region42: #{tversky_ce_dice_loss.1} parent=39 // pred_check_branch
        %576 = sbr.rel (%p574) target = $region44
      $region43: #{tversky_ce_dice_loss.1} parent=39 // pred_region
        %p577 = scmp.lt.s32.totalorder %s19, 1
        %s578 = scalar_select %p577, %s19, 1
        %s579 = smul.addr %s578, 6
        %s580 = smul.addr %s579, 4
        %s581 = scalar_lea.vmem %s2, %s580
      $region44: #{tversky_ce_dice_loss.1} parent=39 // pred_fallthru
        _
    $region40: #{tversky_ce_dice_loss.1} parent=5 // pred_fallthru
      _
  $region6: #{tversky_ce_dice_loss.1} parent=0 // loop_footer
    %s12 = sadd.s32 1, %s8
  $region7: #{tversky_ce_dice_loss.1} parent=0 // loop_footer_branch
    %7 = sbr.rel target = $region3
  $region8: #{tversky_ce_dice_loss.1} parent=0 // loop_exit
    _

</llo_original>
